<compile_context>
chip_gen: v7x
topology: tpu7x:2x2x1
jax: 0.10.0
libtpu: 0.0.40
codegen_flags: <defaults>
</compile_context>

<pallas_src>
import jax
import jax.numpy as jnp
from jax.experimental import pallas as pl
from jax.experimental.pallas import tpu as pltpu

LANES = 128          # vreg lane width (fixed across v5e/v6e/v7x)
SUBLANES = 8         # f32 sublane granularity
MAX_BLOCK_ROWS = 512 # 512 x 128 x 4B = 256 KiB per f32 tile (~85% of HBM roofline)


def _round_up(n: int, m: int) -> int:
    return ((n + m - 1) // m) * m


# ----------------------------------------------------------------------------
# Kernel: elementwise cos(x) - x on one (TM, 128) tile
# ----------------------------------------------------------------------------
def _coisd_kernel(x_ref, o_ref):
    x = x_ref[...]
    # cos() -> EUP, subtract -> VPU; compute in f32 for accuracy.
    y = jnp.cos(x.astype(jnp.float32)) - x.astype(jnp.float32)
    o_ref[...] = y.astype(o_ref.dtype)


# ----------------------------------------------------------------------------
# Wrapper: flatten -> lane-dense 2-D tiles -> pallas_call -> reshape back
# ----------------------------------------------------------------------------
def coisd_forward(x, *, max_block_rows: int = MAX_BLOCK_ROWS):
    """y = cos(x) - x for an arbitrary-shaped array, via a Pallas TPU kernel."""
    orig_shape = x.shape
    orig_dtype = x.dtype
    n = x.size

    # Flatten to a lane-dense (rows, 128) slab.
    rows = pl.cdiv(n, LANES)
    rows_aligned = _round_up(max(rows, 1), SUBLANES)

    # Tile rows: as large as allowed, multiple of 8, dividing the padded rows.
    tm = min(max_block_rows, rows_aligned)
    tm = _round_up(tm, SUBLANES)
    padded_rows = _round_up(rows_aligned, tm)

    flat = jnp.ravel(x)
    pad = padded_rows * LANES - n
    if pad > 0:
        flat = jnp.pad(flat, (0, pad))
    x2d = flat.reshape(padded_rows, LANES)

    grid = (padded_rows // tm,)
    itemsize = jnp.dtype(orig_dtype).itemsize
    cost = pl.CostEstimate(
        flops=n,                 # one subtract per element
        transcendentals=n,       # one cos per element
        bytes_accessed=2 * n * itemsize,
    )

    out2d = pl.pallas_call(
        _coisd_kernel,
        out_shape=jax.ShapeDtypeStruct((padded_rows, LANES), orig_dtype),
        grid=grid,
        in_specs=[pl.BlockSpec((tm, LANES), lambda i: (i, 0))],
        out_specs=pl.BlockSpec((tm, LANES), lambda i: (i, 0)),
        compiler_params=pltpu.CompilerParams(
            dimension_semantics=("parallel",),
        ),
        cost_estimate=cost,
    )(x2d)

    return out2d.reshape(-1)[:n].reshape(orig_shape)


# ----------------------------------------------------------------------------
# Pure-JAX reference (mirrors the PyTorch module exactly)
# ----------------------------------------------------------------------------
def coisd_ref(x):
    return jnp.cos(x) - x


if __name__ == "__main__":
    # Small shape consistent with an elementwise module: x of shape (2, 4, 16, 16).
    key = jax.random.PRNGKey(0)
    x = jax.random.normal(key, (2, 4, 16, 16), jnp.float32)

    out = coisd_forward(x)
    out = jax.block_until_ready(out)

    ref = coisd_ref(x)
    assert out.shape == x.shape
    assert out.dtype == x.dtype
    assert jnp.allclose(out, ref, atol=1e-5, rtol=1e-5), \
        f"max abs diff {jnp.max(jnp.abs(out - ref))}"

    print("KERNEL_OK")
</pallas_src>

<mosaic_0001>
module attributes {stable_mosaic.version = 11 : i64} {
  func.func @_coisd_kernel(%arg0: i32, %arg1: memref<16x128xf32, #tpu.memory_space<vmem>>, %arg2: memref<16x128xf32, #tpu.memory_space<vmem>>) attributes {dimension_semantics = [#tpu.dimension_semantics<parallel>], iteration_bounds = array<i64: 1>, scalar_prefetch = 0 : i64, scratch_operands = 0 : i64, tpu.core_type = #tpu.core_type<tc>, window_params = [{transform_indices = @transform_0, window_bounds = array<i64: 16, 128>}, {transform_indices = @transform_1, window_bounds = array<i64: 16, 128>}]} {
    %c0 = arith.constant 0 : index
    %c0_0 = arith.constant 0 : index
    %0 = vector.load %arg1[%c0, %c0_0] : memref<16x128xf32, #tpu.memory_space<vmem>>, vector<16x128xf32>
    %1 = math.cos %0 : vector<16x128xf32>
    %2 = arith.subf %1, %0 : vector<16x128xf32>
    %c0_1 = arith.constant 0 : index
    %c0_2 = arith.constant 0 : index
    %3 = vector.load %arg2[%c0_1, %c0_2] : memref<16x128xf32, #tpu.memory_space<vmem>>, vector<16x128xf32>
    tpu.vector_store %arg2[%c0_1, %c0_2], %2 {strides = array<i32>} : memref<16x128xf32, #tpu.memory_space<vmem>>, vector<16x128xf32>,
    return
  }
  func.func @transform_0(%arg0: i32) -> (i32, i32) {
    %c0_i32 = arith.constant 0 : i32
    %c0_i32_0 = arith.constant 0 : i32
    return %arg0, %c0_i32 : i32, i32
  }
  func.func @transform_1(%arg0: i32) -> (i32, i32) {
    %c0_i32 = arith.constant 0 : i32
    %c0_i32_0 = arith.constant 0 : i32
    return %arg0, %c0_i32 : i32, i32
  }
}

</mosaic_0001>

<llo_original>
// kernel: tpu_custom_call.1
$region0: #{tpu_custom_call.1}
  #allocation0 [shape = 'u32[]', space=smem, size = 0x4, offset = 0x4, fixed_abs, tag = 'smem constant byte address 0x4 - core index']
  #allocation1 [shape = 'u32[144,128]{1,0:T(1,128)}', space=vmem, size = 0x12000, scoped, tag = 'internal scratch']
  %s0 = inlined_call_operand.hbm [shape: f32[16,128], index: 0, kind: input, shape index: {}]
  %s1 = inlined_call_operand.hbm [shape: f32[16,128], index: 1, kind: output, shape index: {}]
  %s2 = sld [smem:[#allocation0]]
  $region18: #{tpu_custom_call.1} parent=0
    _
  %s4 = ssub.s32 1, %s2
  %s5 = scalar_select 0, %s4, %s2
  $region1: #{tpu_custom_call.1} parent=0
    #allocation2 [shape = 'u8[8192]{0}', space=vmem, size = 0x2000, scoped, tag = 'input window, operand 0, single buffered']
    #allocation3 [shape = 's32[1]{0}', space=sflag, size = 0x4, scoped, tag = 'scoped memory for tpu_custom_call.1']
    #allocation4 [shape = 's32[1]{0}', space=sflag, size = 0x4, scoped, tag = 'scoped memory for tpu_custom_call.1']
    #allocation5 [shape = 'u8[8192]{0}', space=vmem, size = 0x2000, scoped, tag = 'output window, operand 0, single buffered']
    %6 = vsyncpa [#allocation3], 0
    %7 = vsyncpa [#allocation4], 0
    // Predicated region
    $region2: #{tpu_custom_call.1} parent=1 // pred_check
      _
    $region3: #{tpu_custom_call.1} parent=1 // pred_check_branch
      %9 = sbr.rel (0) target = $region5
    $region4: #{tpu_custom_call.1} parent=1 // pred_region
      %s11 = ssub.s32 256, 256
      %12 = vsyncadd [#allocation3], %s11
      %s13 = sshll.u32 [#allocation2], 4
      %s14 = int_to_ptr.vmem [resolvable:$true] %s13
      %19 = dma.hbm_to_vmem [thread:$0]  %s0, 256, %s14, [#allocation3], 128, 128, 8
    $region5: #{tpu_custom_call.1} parent=1 // pred_fallthru
      _
    // Predicated region
    $region6: #{tpu_custom_call.1} parent=1 // pred_check
      _
    $region7: #{tpu_custom_call.1} parent=1 // pred_check_branch
      %21 = sbr.rel (0) target = $region9
    $region8: #{tpu_custom_call.1} parent=1 // pred_region
      %22 = dma.done [#allocation3], 256
    $region9: #{tpu_custom_call.1} parent=1 // pred_fallthru
      _
    %v23 = vld [vmem:[#allocation2] sm:$0xff]
    %v24 = vld [vmem:[#allocation2 + $0x8] sm:$0xff]
    %v25 = vand.u32 2147483647, %v23
    %vm26 = vcmp.le.f32.partialorder %v25, 0.7853982
    %vm27 = vcmp.lt.s32.totalorder %v23, 0
    %v28 = vand.u32 %v23, 2139095040
    %v29 = vshrl.u32 %v28, 23
    %v30 = vsub.s32 %v29, 127
    %v31 = vand.u32 2147483647, %v23
    %v32 = vand.u32 %v31, 8388607
    %v33 = vor.u32 %v32, 8388608
    %v34 = vsub.s32 0, %v33
    %v35 = vadd.s32 %v30, 1
    %vm36 = vcmp.gt.s32.totalorder %v35, 0
    %v37 = vsel %vm36, %v35, 0
    %v38 = vshrl.u32 %v37, 5
    %v39 = vand.u32 %v37, 31
    %v40 = vsub.s32 32, %v39
    %v41 = vshrl.u32 683565275, %v40
    %v42 = vshll.u32 683565275, %v39
    %v43 = vshrl.u32 2475754826, %v40
    %v44 = vor.u32 %v42, %v43
    %v45 = vshll.u32 2475754826, %v39
    %v46 = vshrl.u32 2131351028, %v40
    %v47 = vor.u32 %v45, %v46
    %v48 = vshll.u32 2131351028, %v39
    %v49 = vshrl.u32 2102212464, %v40
    %v50 = vor.u32 %v48, %v49
    %v51 = vshll.u32 2102212464, %v39
    %v52 = vshrl.u32 920167782, %v40
    %v53 = vor.u32 %v51, %v52
    %v54 = vshll.u32 920167782, %v39
    %v55 = vshrl.u32 1326507024, %v40
    %v56 = vor.u32 %v54, %v55
    %vm57 = vcmp.lt.s32.totalorder %v38, 1
    %vm58 = vcmp.lt.s32.totalorder %v38, 2
    %vm59 = vcmp.lt.s32.totalorder %v38, 3
    %vm60 = vcmp.lt.s32.totalorder %v38, 4
    %v61 = vsel %vm57, %v41, %v44
    %v62 = vsel %vm60, %v50, 2102212464
    %v63 = vsel %vm59, %v47, %v62
    %v64 = vsel %vm58, %v61, %v63
    %v65 = vsel %vm57, %v44, %v47
    %v66 = vsel %vm60, %v53, 920167782
    %v67 = vsel %vm59, %v50, %v66
    %v68 = vsel %vm58, %v65, %v67
    %v69 = vsel %vm57, %v47, %v50
    %v70 = vsel %vm60, %v56, 1326507024
    %v71 = vsel %vm59, %v53, %v70
    %v72 = vsel %vm58, %v69, %v71
    %v73 = vshll.u32 %v33, 8
    %v74 = vmul.u32.u64.compose %v73, %v72
    %v75 = vextract.low.u32 %v74
    %v76 = vextract.high.u32 %v74
    %v77 = vmul.u32.u64.compose %v73, %v68
    %v78 = vextract.low.u32 %v77
    %v79 = vextract.high.u32 %v77
    %v80 = vmul.u32 %v73, %v64
    %v81 = vadd.s32 %v76, %v78
    %vm82 = vc.u32 %v76, %v78
    %v83 = vadd.s32 %v79, 1
    %v84 = vsel %vm82, %v83, %v79
    %v85 = vadd.s32 %v80, %v84
    %v86 = vadd.s32 %v85, 536870912
    %v87 = vshrl.u32 %v86, 30
    %v88 = vshll.u32 %v87, 30
    %v89 = vsub.s32 %v85, %v88
    %vm90 = vcmp.lt.s32.totalorder %v89, 0
    %v91 = vsub.s32 0, %v89
    %v92 = vsel %vm90, %v91, %v89
    %v93 = vclz %v92
    %v94 = vsub.s32 %v93, 2
    %vm95 = vcmp.gt.s32.totalorder 0, %v94
    %v96 = vsel %vm95, 0, %v94
    %v97 = vsub.s32 32, %v96
    %v98 = vshll.u32 %v89, %v96
    %v99 = vshrl.u32 %v81, %v97
    %v100 = vor.u32 %v98, %v99
    %v101 = vsub.s32 4294967266, %v96
    %v102 = vadd.s32 %v101, 127
    %v103 = vshll.u32 %v102, 23
    %v104 = vor.u32 4788187, %v103
    %v105 = vand.u32 2147483647, %v104
    %v107 = vcvt.s32.f32 %v100
    %v108 = vmul.f32 %v107, %v105
    %v109 = vxor.u32 %v108, 2147483648
    %v110 = vsel %vm27, %v109, %v108
    %v111 = vsub.s32 4, %v87
    %v112 = vsel %vm27, %v111, %v87
    %v113 = vsel %vm26, %v23, %v110
    %v114 = vsel %vm26, 0, %v112
    %v115 = vcosq.f32.pop %v113
    %v116 = vsinq.f32.pop %v113
    %vm117 = vweird.f32 %v23
    %v118 = vand.u32 %v114, 3
    %vm119 = vcmp.lt.s32.totalorder %v118, 2
    %vm120 = vcmp.eq.s32.totalorder %v118, 0
    %v121 = vxor.u32 %v116, 2147483648
    %v122 = vsel %vm120, %v115, %v121
    %vm123 = vcmp.eq.s32.totalorder %v118, 2
    %v124 = vxor.u32 %v115, 2147483648
    %v125 = vsel %vm123, %v124, %v116
    %v126 = vsel %vm119, %v122, %v125
    %v127 = vsel %vm117, nan, %v126
    %v128 = vand.u32 2147483647, %v24
    %vm129 = vcmp.le.f32.partialorder %v128, 0.7853982
    %vm130 = vcmp.lt.s32.totalorder %v24, 0
    %v131 = vand.u32 %v24, 2139095040
    %v132 = vshrl.u32 %v131, 23
    %v133 = vsub.s32 %v132, 127
    %v134 = vand.u32 2147483647, %v24
    %v135 = vand.u32 %v134, 8388607
    %v136 = vor.u32 %v135, 8388608
    %v137 = vsub.s32 0, %v136
    %v138 = vadd.s32 %v133, 1
    %vm139 = vcmp.gt.s32.totalorder %v138, 0
    %v140 = vsel %vm139, %v138, 0
    %v141 = vshrl.u32 %v140, 5
    %v142 = vand.u32 %v140, 31
    %v143 = vsub.s32 32, %v142
    %v144 = vshrl.u32 683565275, %v143
    %v145 = vshll.u32 683565275, %v142
    %v146 = vshrl.u32 2475754826, %v143
    %v147 = vor.u32 %v145, %v146
    %v148 = vshll.u32 2475754826, %v142
    %v149 = vshrl.u32 2131351028, %v143
    %v150 = vor.u32 %v148, %v149
    %v151 = vshll.u32 2131351028, %v142
    %v152 = vshrl.u32 2102212464, %v143
    %v153 = vor.u32 %v151, %v152
    %v154 = vshll.u32 2102212464, %v142
    %v155 = vshrl.u32 920167782, %v143
    %v156 = vor.u32 %v154, %v155
    %v157 = vshll.u32 920167782, %v142
    %v158 = vshrl.u32 1326507024, %v143
    %v159 = vor.u32 %v157, %v158
    %vm160 = vcmp.lt.s32.totalorder %v141, 1
    %vm161 = vcmp.lt.s32.totalorder %v141, 2
    %vm162 = vcmp.lt.s32.totalorder %v141, 3
    %vm163 = vcmp.lt.s32.totalorder %v141, 4
    %v164 = vsel %vm160, %v144, %v147
    %v165 = vsel %vm163, %v153, 2102212464
    %v166 = vsel %vm162, %v150, %v165
    %v167 = vsel %vm161, %v164, %v166
    %v168 = vsel %vm160, %v147, %v150
    %v169 = vsel %vm163, %v156, 920167782
    %v170 = vsel %vm162, %v153, %v169
    %v171 = vsel %vm161, %v168, %v170
    %v172 = vsel %vm160, %v150, %v153
    %v173 = vsel %vm163, %v159, 1326507024
    %v174 = vsel %vm162, %v156, %v173
    %v175 = vsel %vm161, %v172, %v174
    %v176 = vshll.u32 %v136, 8
    %v177 = vmul.u32.u64.compose %v176, %v175
    %v178 = vextract.low.u32 %v177
    %v179 = vextract.high.u32 %v177
    %v180 = vmul.u32.u64.compose %v176, %v171
    %v181 = vextract.low.u32 %v180
    %v182 = vextract.high.u32 %v180
    %v183 = vmul.u32 %v176, %v167
    %v184 = vadd.s32 %v179, %v181
    %vm185 = vc.u32 %v179, %v181
    %v186 = vadd.s32 %v182, 1
    %v187 = vsel %vm185, %v186, %v182
    %v188 = vadd.s32 %v183, %v187
    %v189 = vadd.s32 %v188, 536870912
    %v190 = vshrl.u32 %v189, 30
    %v191 = vshll.u32 %v190, 30
    %v192 = vsub.s32 %v188, %v191
    %vm193 = vcmp.lt.s32.totalorder %v192, 0
    %v194 = vsub.s32 0, %v192
    %v195 = vsel %vm193, %v194, %v192
    %v196 = vclz %v195
    %v197 = vsub.s32 %v196, 2
    %vm198 = vcmp.gt.s32.totalorder 0, %v197
    %v199 = vsel %vm198, 0, %v197
    %v200 = vsub.s32 32, %v199
    %v201 = vshll.u32 %v192, %v199
    %v202 = vshrl.u32 %v184, %v200
    %v203 = vor.u32 %v201, %v202
    %v204 = vsub.s32 4294967266, %v199
    %v205 = vadd.s32 %v204, 127
    %v206 = vshll.u32 %v205, 23
    %v207 = vor.u32 4788187, %v206
    %v208 = vand.u32 2147483647, %v207
    %v210 = vcvt.s32.f32 %v203
    %v211 = vmul.f32 %v210, %v208
    %v212 = vxor.u32 %v211, 2147483648
    %v213 = vsel %vm130, %v212, %v211
    %v214 = vsub.s32 4, %v190
    %v215 = vsel %vm130, %v214, %v190
    %v216 = vsel %vm129, %v24, %v213
    %v217 = vsel %vm129, 0, %v215
    %v218 = vcosq.f32.pop %v216
    %v219 = vsinq.f32.pop %v216
    %vm220 = vweird.f32 %v24
    %v221 = vand.u32 %v217, 3
    %vm222 = vcmp.lt.s32.totalorder %v221, 2
    %vm223 = vcmp.eq.s32.totalorder %v221, 0
    %v224 = vxor.u32 %v219, 2147483648
    %v225 = vsel %vm223, %v218, %v224
    %vm226 = vcmp.eq.s32.totalorder %v221, 2
    %v227 = vxor.u32 %v218, 2147483648
    %v228 = vsel %vm226, %v227, %v219
    %v229 = vsel %vm222, %v225, %v228
    %v230 = vsel %vm220, nan, %v229
    %v231 = vsub.f32 %v127, %v23
    %v232 = vsub.f32 %v230, %v24
    %233 = vst [vmem:[#allocation5] sm:$0xff] %v231
    %234 = vst [vmem:[#allocation5 + $0x8] sm:$0xff] %v232
    // Predicated region
    $region10: #{tpu_custom_call.1} parent=1 // pred_check
      _
    $region11: #{tpu_custom_call.1} parent=1 // pred_check_branch
      %236 = sbr.rel (0) target = $region13
    $region12: #{tpu_custom_call.1} parent=1 // pred_region
      %s238 = ssub.s32 256, 256
      %239 = vsyncadd [#allocation4], %s238
      %s240 = sshll.u32 [#allocation5], 4
      %s241 = int_to_ptr.vmem [resolvable:$true] %s240
      %246 = dma.vmem_to_hbm [thread:$0]  %s241, 256, %s1, [#allocation4], 128, 128, 8
    $region13: #{tpu_custom_call.1} parent=1 // pred_fallthru
      _
    // Predicated region
    $region14: #{tpu_custom_call.1} parent=1 // pred_check
      _
    $region15: #{tpu_custom_call.1} parent=1 // pred_check_branch
      %248 = sbr.rel (0) target = $region17
    $region16: #{tpu_custom_call.1} parent=1 // pred_region
      %249 = dma.done [#allocation4], 256
    $region17: #{tpu_custom_call.1} parent=1 // pred_fallthru
      _
    %250 = vsyncpa [#allocation3], 1
    %251 = vsyncpa [#allocation4], 1

</llo_original>
